<compile_context>
chip_gen: v7x
topology: tpu7x:2x2x1
jax: 0.10.0
libtpu: 0.0.40
codegen_flags: <defaults>
</compile_context>

<pallas_src>
import functools

import jax
import jax.numpy as jnp
from jax.experimental import pallas as pl
from jax.experimental.pallas import tpu as pltpu


def _vmem_capacity_bytes():
    """Physical VMEM per TensorCore; conservative fallback if query fails."""
    try:
        return int(pltpu.get_tpu_info().vmem_capacity_bytes)
    except Exception:
        return 64 * 1024 * 1024  # v7x-sized fallback; safe everywhere


def _byol_loss_kernel(x1_ref, x2_ref, o_ref, *, n_total, tn):
    i = pl.program_id(0)

    # Upcast in-kernel; all accumulation in f32 (inputs may be bf16 in HBM).
    x1 = x1_ref[...].astype(jnp.float32)
    x2 = x2_ref[...].astype(jnp.float32)

    # torch F.normalize uses x / max(||x||, 1e-12).  Per-row cosine:
    #   s12 / (max(||x1||, eps) * max(||x2||, eps))
    # = s12 * rsqrt(max(s11, eps^2) * max(s22, eps^2))   (rsqrt -> EUP slot)
    eps2 = jnp.float32(1e-24)
    s11 = jnp.sum(x1 * x1, axis=-1, keepdims=True)
    s22 = jnp.sum(x2 * x2, axis=-1, keepdims=True)
    s12 = jnp.sum(x1 * x2, axis=-1, keepdims=True)
    cos = s12 * jax.lax.rsqrt(jnp.maximum(s11, eps2) * jnp.maximum(s22, eps2))

    # Mask rows of the ragged last tile BEFORE reducing, so unspecified data
    # (possibly NaN/Inf) in out-of-bounds rows contributes exactly 0.
    row_ids = i * tn + jax.lax.broadcasted_iota(jnp.int32, cos.shape, 0)
    cos = jnp.where(row_ids < n_total, cos, jnp.float32(0.0))

    # Independent per-tile partial sum -> no carried dependency across grid
    # steps; one tiny XLU reduce per multi-MiB tile.
    partial = jnp.sum(cos)
    o_ref[...] = jnp.full(o_ref.shape, partial, dtype=jnp.float32)


def byol_loss(x1, x2, *, vmem_budget_bytes=None):
    """Pallas BYOL loss. x1, x2: (N, C) arrays. Returns scalar float32."""
    assert x1.shape == x2.shape and x1.ndim == 2
    n, c = x1.shape
    itemsize = jnp.dtype(x1.dtype).itemsize

    # Generation-aware VMEM budgeting (v5e/v6e: 128 MiB, v7x: 64 MiB).
    vmem_cap = _vmem_capacity_bytes()
    if vmem_budget_bytes is None:
        vmem_budget_bytes = (vmem_cap * 3) // 8        # ~24 MiB v7x, ~48 MiB v5e/v6e
    vmem_budget_bytes = int(min(vmem_budget_bytes, (vmem_cap * 3) // 4))

    # Sublane-packing multiple for the input dtype (8 f32, 16 bf16, 32 int8/fp8).
    sub = max(8, 32 // max(itemsize, 1))

    # Bytes per tile row:
    #   2 inputs x 2 pipeline buffers in the input dtype   -> 4 * c * itemsize
    #   + in-kernel f32 upcast copies / elementwise temps  -> ~4 * c * 4
    bytes_per_row = c * (4 * itemsize + 4 * 4)
    tn = vmem_budget_bytes // bytes_per_row
    tn = max(sub, (tn // sub) * sub)        # sublane-multiple row tile
    tn = min(tn, 4096)                      # cap at a few thousand rows
    tn = min(tn, -(-n // sub) * sub)        # never bigger than rounded-up N
    tn = max(tn, sub)

    num_tiles = -(-n // tn)                 # ragged last tile masked in-kernel

    kernel = functools.partial(_byol_loss_kernel, n_total=n, tn=tn)

    block_bytes = tn * c * (4 * itemsize + 4 * 4)
    vmem_limit = int(max(16 << 20,
                         min(block_bytes + (4 << 20), (vmem_cap * 3) // 4)))

    # NOTE: pipeline_mode=pl.Buffered(3) on the in_specs can help when tiles
    # end up small (< ~2 MiB); left at the default 2-deep pipeline here.
    partials = pl.pallas_call(
        kernel,
        out_shape=jax.ShapeDtypeStruct((num_tiles, 8, 128), jnp.float32),
        grid_spec=pltpu.PrefetchScalarGridSpec(
            num_scalar_prefetch=0,
            grid=(num_tiles,),
            in_specs=[
                pl.BlockSpec((tn, c), lambda i: (i, 0)),
                pl.BlockSpec((tn, c), lambda i: (i, 0)),
            ],
            out_specs=pl.BlockSpec((1, 8, 128), lambda i: (i, 0, 0)),
        ),
        compiler_params=pltpu.CompilerParams(
            dimension_semantics=("parallel",),
            vmem_limit_bytes=vmem_limit,
        ),
        cost_estimate=pl.CostEstimate(
            flops=6 * n * c,
            transcendentals=n,
            bytes_accessed=2 * n * c * itemsize + num_tiles * 8 * 128 * 4,
        ),
    )(x1, x2)

    total = jnp.sum(partials[:, 0, 0], dtype=jnp.float32)
    return jnp.float32(2.0) - jnp.float32(2.0) * total / jnp.float32(n)


if __name__ == "__main__":
    key = jax.random.PRNGKey(0)
    k1, k2 = jax.random.split(key)
    N, C = 8, 32  # small batch of embeddings, hidden dim 32
    x1 = jax.random.normal(k1, (N, C), dtype=jnp.float32)
    x2 = jax.random.normal(k2, (N, C), dtype=jnp.float32)

    loss = jax.block_until_ready(byol_loss(x1, x2))

    # Pure-JAX reference check (matches torch F.normalize semantics).
    def ref(a, b):
        an = a / jnp.maximum(jnp.linalg.norm(a, axis=-1, keepdims=True), 1e-12)
        bn = b / jnp.maximum(jnp.linalg.norm(b, axis=-1, keepdims=True), 1e-12)
        return 2.0 - 2.0 * jnp.mean(jnp.sum(an * bn, axis=-1))

    assert jnp.allclose(loss, ref(x1, x2), atol=1e-5), (loss, ref(x1, x2))
    print("KERNEL_OK")
</pallas_src>

<mosaic_0001>
module attributes {stable_mosaic.version = 11 : i64} {
  func.func @_byol_loss_kernel(%arg0: i32, %arg1: memref<8x32xf32, #tpu.memory_space<vmem>>, %arg2: memref<8x32xf32, #tpu.memory_space<vmem>>, %arg3: memref<1x8x128xf32, #tpu.memory_space<vmem>>) attributes {dimension_semantics = [#tpu.dimension_semantics<parallel>], iteration_bounds = array<i64: 1>, scalar_prefetch = 0 : i64, scratch_operands = 0 : i64, tpu.core_type = #tpu.core_type<tc>, window_params = [{transform_indices = @transform_0, window_bounds = array<i64: 8, 32>}, {transform_indices = @transform_1, window_bounds = array<i64: 8, 32>}, {transform_indices = @transform_2, window_bounds = array<i64: 1, 8, 128>}]} {
    %c0 = arith.constant 0 : index
    %c0_0 = arith.constant 0 : index
    %0 = vector.load %arg1[%c0, %c0_0] : memref<8x32xf32, #tpu.memory_space<vmem>>, vector<8x32xf32>
    %c0_1 = arith.constant 0 : index
    %c0_2 = arith.constant 0 : index
    %1 = vector.load %arg2[%c0_1, %c0_2] : memref<8x32xf32, #tpu.memory_space<vmem>>, vector<8x32xf32>
    %2 = arith.mulf %0, %0 : vector<8x32xf32>
    %cst = arith.constant dense<0.000000e+00> : vector<8xf32>
    %3 = vector.multi_reduction <add>, %2, %cst [1] : vector<8x32xf32> to vector<8xf32>
    %4 = vector.shape_cast %3 : vector<8xf32> to vector<8x1xf32>
    %5 = arith.mulf %1, %1 : vector<8x32xf32>
    %cst_3 = arith.constant dense<0.000000e+00> : vector<8xf32>
    %6 = vector.multi_reduction <add>, %5, %cst_3 [1] : vector<8x32xf32> to vector<8xf32>
    %7 = vector.shape_cast %6 : vector<8xf32> to vector<8x1xf32>
    %8 = arith.mulf %0, %1 : vector<8x32xf32>
    %cst_4 = arith.constant dense<0.000000e+00> : vector<8xf32>
    %9 = vector.multi_reduction <add>, %8, %cst_4 [1] : vector<8x32xf32> to vector<8xf32>
    %10 = vector.shape_cast %9 : vector<8xf32> to vector<8x1xf32>
    %cst_5 = arith.constant 1.000000e-24 : f32
    %11 = vector.broadcast %cst_5 : f32 to vector<8x1xf32>
    %12 = arith.maximumf %4, %11 : vector<8x1xf32>
    %cst_6 = arith.constant 1.000000e-24 : f32
    %13 = vector.broadcast %cst_6 : f32 to vector<8x1xf32>
    %14 = arith.maximumf %7, %13 : vector<8x1xf32>
    %15 = arith.mulf %12, %14 : vector<8x1xf32>
    %16 = math.rsqrt %15 : vector<8x1xf32>
    %17 = arith.mulf %10, %16 : vector<8x1xf32>
    %c8_i32 = arith.constant 8 : i32
    %18 = arith.muli %arg0, %c8_i32 : i32
    %19 = tpu.iota {dimensions = array<i32: 0>} : vector<8x1xi32>
    %20 = vector.broadcast %18 : i32 to vector<8x1xi32>
    %21 = arith.addi %20, %19 : vector<8x1xi32>
    %c8_i32_7 = arith.constant 8 : i32
    %22 = vector.broadcast %c8_i32_7 : i32 to vector<8x1xi32>
    %23 = arith.cmpi slt, %21, %22 : vector<8x1xi32>
    %cst_8 = arith.constant 0.000000e+00 : f32
    %24 = vector.broadcast %cst_8 : f32 to vector<8x1xf32>
    %25 = arith.select %23, %17, %24 : vector<8x1xi1>, vector<8x1xf32>
    %26 = vector.shape_cast %25 : vector<8x1xf32> to vector<1x8x1xf32>
    %cst_9 = arith.constant dense<0.000000e+00> : vector<1xf32>
    %27 = vector.multi_reduction <add>, %26, %cst_9 [1, 2] : vector<1x8x1xf32> to vector<1xf32>
    %28 = vector.shape_cast %27 : vector<1xf32> to vector<1x1x1xf32>
    %29 = vector.extract %28[0, 0, 0] : f32 from vector<1x1x1xf32>
    %30 = vector.broadcast %29 : f32 to vector<1x8x128xf32>
    %c0_10 = arith.constant 0 : index
    %c0_11 = arith.constant 0 : index
    %c0_12 = arith.constant 0 : index
    %31 = vector.load %arg3[%c0_10, %c0_11, %c0_12] : memref<1x8x128xf32, #tpu.memory_space<vmem>>, vector<1x8x128xf32>
    tpu.vector_store %arg3[%c0_10, %c0_11, %c0_12], %30 {strides = array<i32>} : memref<1x8x128xf32, #tpu.memory_space<vmem>>, vector<1x8x128xf32>,
    return
  }
  func.func @transform_0(%arg0: i32) -> (i32, i32) {
    %c0_i32 = arith.constant 0 : i32
    %c0_i32_0 = arith.constant 0 : i32
    return %arg0, %c0_i32 : i32, i32
  }
  func.func @transform_1(%arg0: i32) -> (i32, i32) {
    %c0_i32 = arith.constant 0 : i32
    %c0_i32_0 = arith.constant 0 : i32
    return %arg0, %c0_i32 : i32, i32
  }
  func.func @transform_2(%arg0: i32) -> (i32, i32, i32) {
    %c0_i32 = arith.constant 0 : i32
    %c0_i32_0 = arith.constant 0 : i32
    %c0_i32_1 = arith.constant 0 : i32
    return %arg0, %c0_i32, %c0_i32_0 : i32, i32, i32
  }
}

</mosaic_0001>

<llo_original>
// kernel: tpu_custom_call.1
$region0: #{tpu_custom_call.1}
  #allocation0 [shape = 'u32[]', space=smem, size = 0x4, offset = 0x4, fixed_abs, tag = 'smem constant byte address 0x4 - core index']
  #allocation1 [shape = 'u32[144,128]{1,0:T(1,128)}', space=vmem, size = 0x12000, scoped, tag = 'internal scratch']
  %s0 = inlined_call_operand.hbm [shape: f32[8,32], index: 0, kind: input, shape index: {}]
  %s1 = inlined_call_operand.hbm [shape: f32[8,32], index: 1, kind: input, shape index: {}]
  %s2 = inlined_call_operand.hbm [shape: f32[1,8,128], index: 2, kind: output, shape index: {}]
  %s3 = sld [smem:[#allocation0]]
  $region26: #{tpu_custom_call.1} parent=0
    _
  %s5 = ssub.s32 1, %s3
  %s6 = scalar_select 0, %s5, %s3
  $region1: #{tpu_custom_call.1} parent=0
    #allocation2 [shape = 'u8[4096]{0}', space=vmem, size = 0x1000, scoped, tag = 'input window, operand 0, single buffered']
    #allocation3 [shape = 's32[1]{0}', space=sflag, size = 0x4, scoped, tag = 'scoped memory for tpu_custom_call.1']
    #allocation4 [shape = 's32[1]{0}', space=sflag, size = 0x4, scoped, tag = 'scoped memory for tpu_custom_call.1']
    #allocation5 [shape = 'u8[4096]{0}', space=vmem, size = 0x1000, scoped, tag = 'input window, operand 1, single buffered']
    #allocation6 [shape = 's32[1]{0}', space=sflag, size = 0x4, scoped, tag = 'scoped memory for tpu_custom_call.1']
    #allocation7 [shape = 'u8[4096]{0}', space=vmem, size = 0x1000, scoped, tag = 'output window, operand 0, single buffered']
    %7 = vsyncpa [#allocation3], 0
    %8 = vsyncpa [#allocation6], 0
    %9 = vsyncpa [#allocation4], 0
    // Predicated region
    $region2: #{tpu_custom_call.1} parent=1 // pred_check
      _
    $region3: #{tpu_custom_call.1} parent=1 // pred_check_branch
      %11 = sbr.rel (0) target = $region5
    $region4: #{tpu_custom_call.1} parent=1 // pred_region
      %s13 = ssub.s32 128, 128
      %14 = vsyncadd [#allocation3], %s13
      %s16 = sshll.u32 [#allocation2], 4
      %s17 = int_to_ptr.vmem [resolvable:$true] %s16
      %19 = dma.hbm_to_vmem [thread:$0]  %s0, 128, %s17, [#allocation3]
    $region5: #{tpu_custom_call.1} parent=1 // pred_fallthru
      _
    // Predicated region
    $region6: #{tpu_custom_call.1} parent=1 // pred_check
      _
    $region7: #{tpu_custom_call.1} parent=1 // pred_check_branch
      %21 = sbr.rel (0) target = $region9
    $region8: #{tpu_custom_call.1} parent=1 // pred_region
      %s23 = ssub.s32 128, 128
      %24 = vsyncadd [#allocation6], %s23
      %s26 = sshll.u32 [#allocation5], 4
      %s27 = int_to_ptr.vmem [resolvable:$true] %s26
      %29 = dma.hbm_to_vmem [thread:$0]  %s1, 128, %s27, [#allocation6]
    $region9: #{tpu_custom_call.1} parent=1 // pred_fallthru
      _
    // Predicated region
    $region10: #{tpu_custom_call.1} parent=1 // pred_check
      _
    $region11: #{tpu_custom_call.1} parent=1 // pred_check_branch
      %31 = sbr.rel (0) target = $region13
    $region12: #{tpu_custom_call.1} parent=1 // pred_region
      %32 = dma.done [#allocation3], 128
    $region13: #{tpu_custom_call.1} parent=1 // pred_fallthru
      _
    // Predicated region
    $region14: #{tpu_custom_call.1} parent=1 // pred_check
      _
    $region15: #{tpu_custom_call.1} parent=1 // pred_check_branch
      %34 = sbr.rel (0) target = $region17
    $region16: #{tpu_custom_call.1} parent=1 // pred_region
      %35 = dma.done [#allocation6], 128
    $region17: #{tpu_custom_call.1} parent=1 // pred_fallthru
      _
    %v36 = vld [vmem:[#allocation2] sm:$0xff]
    %v37 = vld [vmem:[#allocation5] sm:$0xff]
    %v38 = vmul.f32 %v36, %v36
    %vm39 = vcmask 261120
    %v40 = vsel %vm39, %v38, 0.0
    %41 = vadd.xlane.f32.xlu0 %v40
    %v42 = vpop.xlane.xlu0 %41
    %v43 = vmul.f32 %v37, %v37
    %v44 = vsel %vm39, %v43, 0.0
    %45 = vadd.xlane.f32.xlu0 %v44
    %v46 = vpop.xlane.xlu0 %45
    %v47 = vmul.f32 %v36, %v37
    %v48 = vsel %vm39, %v47, 0.0
    %49 = vadd.xlane.f32.xlu0 %v48
    %v50 = vpop.xlane.xlu0 %49
    %v51 = vmax.f32 %v42, 1e-24
    %v52 = vmax.f32 %v46, 1e-24
    %v53 = vmul.f32 %v51, %v52
    %v54 = vrsqrt.pop %v53
    %v55 = vmul.f32 %v50, %v54
    %s56 = smul.u32 0, 8
    %v57 = vlaneseq
    %v58 = vshrl.u32 %v57, 7
    %v59 = vstv %s56
    %v60 = vadd.s32 %v59, %v58
    %vm61 = vcmp.lt.s32.totalorder %v60, 8
    %v62 = vsel %vm61, %v55, 0.0
    %vm63 = vcmask 7168
    %v64 = vsel %vm63, %v62, 0.0
    %65 = vadd.xlane.f32.xlu0 %v64
    %v66 = vpop.xlane.xlu0 %65
    %v67 = vrot.slane %v66, 4
    %v68 = vadd.f32 %v66, %v67
    %v69 = vrot.slane %v68, 2
    %v70 = vadd.f32 %v68, %v69
    %v71 = vrot.slane %v70, 1
    %v72 = vadd.f32 %v70, %v71
    %s73 = vtos %v72
    %v74 = vstv %s73
    %75 = vst [vmem:[#allocation7] sm:$0xff] %v74
    // Predicated region
    $region18: #{tpu_custom_call.1} parent=1 // pred_check
      _
    $region19: #{tpu_custom_call.1} parent=1 // pred_check_branch
      %77 = sbr.rel (0) target = $region21
    $region20: #{tpu_custom_call.1} parent=1 // pred_region
      %s79 = ssub.s32 128, 128
      %80 = vsyncadd [#allocation4], %s79
      %s82 = sshll.u32 [#allocation7], 4
      %s83 = int_to_ptr.vmem [resolvable:$true] %s82
      %85 = dma.vmem_to_hbm [thread:$0]  %s83, 128, %s2, [#allocation4]
    $region21: #{tpu_custom_call.1} parent=1 // pred_fallthru
      _
    // Predicated region
    $region22: #{tpu_custom_call.1} parent=1 // pred_check
      _
    $region23: #{tpu_custom_call.1} parent=1 // pred_check_branch
      %87 = sbr.rel (0) target = $region25
    $region24: #{tpu_custom_call.1} parent=1 // pred_region
      %88 = dma.done [#allocation4], 128
    $region25: #{tpu_custom_call.1} parent=1 // pred_fallthru
      _
    %89 = vsyncpa [#allocation3], 1
    %90 = vsyncpa [#allocation6], 1
    %91 = vsyncpa [#allocation4], 1

</llo_original>
